<compile_context>
chip_gen: v5e
topology: v5e:2x2
jax: 0.10.0
libtpu: 0.0.40
codegen_flags: <defaults>
</compile_context>

<pallas_src>
import numpy as np
import jax
import jax.numpy as jnp
from jax.experimental import pallas as pl
from jax.experimental.pallas import tpu as pltpu

# ---------------- config (mirrors data_args / model_args) ----------------
B = 2          # batch size (trees)
M = 4          # max tweets per tree
T = 8          # data_args.max_tweet_length (tokens per tweet)
H = 32         # hidden_size
L = 2          # num_labels
N_PAD = 8      # padded total node count across the batch (sum(tree_lens) <= N_PAD)
B_PAD = 8      # padded tree count (full sublane tile)
SEG = 128      # lane segment width (lane-dense tiles everywhere)
K_PAD = 128    # padded contraction dim for token-states / weight rows

assert N_PAD == 8 and B_PAD == 8, "bias tiles are pre-replicated over 8 sublane rows"
assert N_PAD * T <= K_PAD


# ---------------------------- Pallas kernel ------------------------------
def gcn_head_kernel(states_ref, graph_ref, params_ref, out_ref):
    f32 = jnp.float32

    states = states_ref[...]                      # (K_PAD, SEG): token feats, zero-padded
    a1 = graph_ref[0:N_PAD, :]                    # (8,128) A_hat @ Mpool (cols >= 64 zero)
    adj = graph_ref[N_PAD:2 * N_PAD, 0:N_PAD]     # (8,8)   normalized A_hat
    pool = graph_ref[2 * N_PAD:3 * N_PAD, 0:N_PAD]  # (8,8)  scatter_mean matrix

    # static, tile-aligned views into the packed parameters (zero-cost slices)
    w1 = params_ref[0:K_PAD, 0 * SEG:1 * SEG]     # (128,128), rows >= H and cols >= H zero
    w2 = params_ref[0:K_PAD, 1 * SEG:2 * SEG]
    wfc = params_ref[0:K_PAD, 2 * SEG:3 * SEG]
    wcls = params_ref[0:K_PAD, 3 * SEG:4 * SEG]   # cols >= L zero
    b1 = params_ref[K_PAD:K_PAD + 8, 0 * SEG:1 * SEG]   # (8,128), bias replicated per row
    b2 = params_ref[K_PAD:K_PAD + 8, 1 * SEG:2 * SEG]
    bfc = params_ref[K_PAD:K_PAD + 8, 2 * SEG:3 * SEG]
    bcls = params_ref[K_PAD:K_PAD + 8, 3 * SEG:4 * SEG]

    # layer 1:  relu(A_hat @ mean_pool(tokens) @ W1 + b1), with A_hat @ Mpool folded on host
    nodes = jnp.dot(a1, states, preferred_element_type=f32)               # (8,128)
    h = jnp.maximum(jnp.dot(nodes, w1, preferred_element_type=f32) + b1, 0.0)

    # layer 2:  relu(A_hat @ h @ W2 + b2)   (dropout after layer 1 is identity in eval)
    h = jnp.dot(adj, h, preferred_element_type=f32)
    h = jnp.maximum(jnp.dot(h, w2, preferred_element_type=f32) + b2, 0.0)

    # scatter_mean over trees expressed as a dense matmul -> (B_PAD, 128)
    tree = jnp.dot(pool, h, preferred_element_type=f32)

    # fc + tanh
    pooled = jnp.tanh(jnp.dot(tree, wfc, preferred_element_type=f32) + bfc)

    # classifier (dropout before it is identity in eval); single unmasked lane-dense store
    out_ref[...] = jnp.dot(pooled, wcls, preferred_element_type=f32) + bcls


def run_gcn_head(states_pad, graph_ops, params_packed):
    args = (states_pad, graph_ops, params_packed)
    out = pl.pallas_call(
        gcn_head_kernel,
        out_shape=jax.ShapeDtypeStruct((B_PAD, SEG), jnp.float32),
        in_specs=[pl.BlockSpec(memory_space=pltpu.MemorySpace.VMEM) for _ in args],
        out_specs=pl.BlockSpec(memory_space=pltpu.MemorySpace.VMEM),
    )(*args)
    return out[:B, :L]


# ------------------------------ glue -------------------------------------
def build_norm_adj(edges, n_nodes, n_pad):
    """GCNConv gcn_norm: add self loops (weight 1), symmetric normalization, dense."""
    row = np.concatenate([edges[0], np.arange(n_nodes)]).astype(np.int64)   # sources
    col = np.concatenate([edges[1], np.arange(n_nodes)]).astype(np.int64)   # targets
    w = np.ones(row.shape[0], np.float32)
    deg = np.zeros(n_nodes, np.float32)
    np.add.at(deg, col, w)
    dinv = np.where(deg > 0, 1.0 / np.sqrt(deg), 0.0).astype(np.float32)
    norm = dinv[row] * w * dinv[col]
    A = np.zeros((n_pad, n_pad), np.float32)
    np.add.at(A, (col, row), norm)     # out[i] = sum_{(j->i)} norm * x[j]
    return A


def prepare_batch_dense(hidden_states, attention_msk, tree_lens, edge_index):
    """Mirror of GCNPooler.prepare_batch, emitting dense (padded) operands:
       states_flat (N_PAD*T, H), mpool (N_PAD, N_PAD*T) block-diag masked-mean matrix,
       adj (N_PAD, N_PAD) normalized A-hat, pool (B_PAD, N_PAD) scatter_mean matrix."""
    hs = hidden_states.reshape(B, M, T, H)
    am = attention_msk.reshape(B, M, T)
    node_states, node_masks, edges_all, index = [], [], [], []
    root = 0
    for b in range(B):
        n = int(tree_lens[b])
        node_states.append(hs[b, :n])
        node_masks.append(am[b, :n])
        e = np.asarray(edge_index[b])
        e = e[:, e[0] != -1]
        edges_all.append(e + root)
        index.extend([b] * n)
        root += n
    n_nodes = root
    node_states = jnp.concatenate(node_states, axis=0)
    node_masks = jnp.concatenate(node_masks, axis=0).astype(jnp.float32)
    pad = N_PAD - n_nodes
    node_states = jnp.pad(node_states, ((0, pad), (0, 0), (0, 0)))
    node_masks = jnp.pad(node_masks, ((0, pad), (0, 0)))

    # masked token-mean as a matmul operand: mpool[i, j*T + t] = (i==j) * mask[i,t]/denom[i]
    denom = jnp.maximum(node_masks.sum(axis=1, keepdims=True), 1e-9)
    weights = node_masks / denom                                     # (N_PAD, T)
    eye = jnp.eye(N_PAD, dtype=jnp.float32)
    mpool = (eye[:, :, None] * weights[None, :, :]).reshape(N_PAD, N_PAD * T)
    states_flat = node_states.reshape(N_PAD * T, H)

    edges = np.concatenate(edges_all, axis=1)
    adj = build_norm_adj(edges, n_nodes, N_PAD)

    # scatter_mean as a (B_PAD, N_PAD) averaging matrix; padded rows/cols stay zero
    P = np.zeros((B_PAD, N_PAD), np.float32)
    for i, b in enumerate(index):
        P[b, i] = 1.0 / float(max(int(tree_lens[b]), 1))
    return states_flat, mpool, jnp.asarray(adj), jnp.asarray(P)


def pack_graph_operands(states_flat, mpool, adj, pool):
    """Fold A1 = A_hat @ Mpool on host and row-stack the small graph operands into one
    (24, 128) array; pad token states to a lane/sublane-dense (128, 128) tile."""
    a1 = np.asarray(adj) @ np.asarray(mpool)                 # (N_PAD, N_PAD*T)
    g = np.zeros((3 * N_PAD, SEG), np.float32)
    g[0:N_PAD, 0:N_PAD * T] = a1
    g[N_PAD:2 * N_PAD, 0:N_PAD] = np.asarray(adj)
    g[2 * N_PAD:3 * N_PAD, 0:N_PAD] = np.asarray(pool)

    s = np.zeros((K_PAD, SEG), np.float32)
    s[0:N_PAD * T, 0:H] = np.asarray(states_flat)
    return jnp.asarray(s), jnp.asarray(g)


def init_params(key):
    ks = jax.random.split(key, 4)
    std = 0.02
    return {
        "w1": std * jax.random.normal(ks[0], (H, H), jnp.float32),    # GCNConv1 lin (out,in)
        "b1": jnp.zeros((H,), jnp.float32),
        "w2": std * jax.random.normal(ks[1], (H, H), jnp.float32),    # GCNConv2 lin (out,in)
        "b2": jnp.zeros((H,), jnp.float32),
        "wfc": std * jax.random.normal(ks[2], (H, H), jnp.float32),   # pooler fc (out,in)
        "bfc": jnp.zeros((H,), jnp.float32),
        "wcls": std * jax.random.normal(ks[3], (L, H), jnp.float32),  # classifier (out,in)
        "bcls": jnp.zeros((L,), jnp.float32),
    }


def pack_params(p):
    """Pack 4 weights + 4 biases into ONE (K_PAD + 8, 4*SEG) array (single DMA).
    Rows 0..127: weight matrices pre-transposed to (in, out), each in its own 128-lane
    segment, zero-padded to (128, 128). Rows 128..135: each bias replicated across the
    8 sublane rows of its segment so the in-kernel bias add is a plain vreg add."""
    w = np.zeros((K_PAD + 8, 4 * SEG), np.float32)
    w[0:H, 0 * SEG:0 * SEG + H] = np.asarray(p["w1"]).T
    w[0:H, 1 * SEG:1 * SEG + H] = np.asarray(p["w2"]).T
    w[0:H, 2 * SEG:2 * SEG + H] = np.asarray(p["wfc"]).T
    w[0:H, 3 * SEG:3 * SEG + L] = np.asarray(p["wcls"]).T
    w[K_PAD:K_PAD + 8, 0 * SEG:0 * SEG + H] = np.asarray(p["b1"])[None, :]
    w[K_PAD:K_PAD + 8, 1 * SEG:1 * SEG + H] = np.asarray(p["b2"])[None, :]
    w[K_PAD:K_PAD + 8, 2 * SEG:2 * SEG + H] = np.asarray(p["bfc"])[None, :]
    w[K_PAD:K_PAD + 8, 3 * SEG:3 * SEG + L] = np.asarray(p["bcls"])[None, :]
    return jnp.asarray(w)


def reference(states_flat, mpool, adj, pool, p):
    nodes = mpool @ states_flat
    h = jnp.maximum(adj @ (nodes @ p["w1"].T) + p["b1"][None, :], 0.0)
    h = jnp.maximum(adj @ (h @ p["w2"].T) + p["b2"][None, :], 0.0)
    tree = pool @ h
    pooled = jnp.tanh(tree @ p["wfc"].T + p["bfc"][None, :])
    return (pooled @ p["wcls"].T + p["bcls"][None, :])[:B]


# ------------------------------ main --------------------------------------
if __name__ == "__main__":
    key = jax.random.PRNGKey(0)
    k_h, k_p = jax.random.split(key)

    # inputs as GCNForClassification.forward expects (flattened tweets along seq dim)
    hidden_states = jax.random.normal(k_h, (B, M * T, H), jnp.float32)
    attention_msk = jnp.tile(
        jnp.array([1, 1, 1, 1, 1, 1, 0, 0], jnp.float32), (B, M))          # (B, M*T)
    tree_lens = np.array([3, 2], np.int32)
    td_edges = np.array(
        [[[0, 0, -1], [1, 2, -1]],          # tree 0: 0->1, 0->2
         [[0, -1, -1], [1, -1, -1]]],       # tree 1: 0->1
        np.int64)                           # (B, 2, E_max), -1 padded

    params = init_params(k_p)
    params_packed = pack_params(params)
    states_flat, mpool, adj, pool = prepare_batch_dense(
        hidden_states, attention_msk, tree_lens, td_edges)
    states_pad, graph_ops = pack_graph_operands(states_flat, mpool, adj, pool)

    logits = run_gcn_head(states_pad, graph_ops, params_packed)
    logits = jax.block_until_ready(logits)

    ref = reference(states_flat, mpool, adj, pool, params)
    assert logits.shape == (B, L)
    assert np.all(np.isfinite(np.asarray(logits)))
    np.testing.assert_allclose(np.asarray(logits), np.asarray(ref), rtol=1e-3, atol=1e-4)

    # TODO(synk): edge_filter (Linear+Sigmoid edge weights) and bu_gcn branches are disabled
    # by the chosen config (model_args.edge_filter=False, bu_gcn=False) and are not lowered.
    # TODO(synk): when many graphs are batched, add a leading "parallel" grid axis over
    # graph blocks (2 TCs on v7x) and cast MXU operands to bf16 on v6e/v7x; at these toy
    # shapes the kernel is launch/DMA-latency bound and f32 + grid-less is the right shape.
    print("KERNEL_OK")
</pallas_src>

<mosaic_0001>
module attributes {stable_mosaic.version = 11 : i64} {
  func.func @gcn_head_kernel(%arg0: memref<128x128xf32, #tpu.memory_space<vmem>>, %arg1: memref<24x128xf32, #tpu.memory_space<vmem>>, %arg2: memref<136x512xf32, #tpu.memory_space<vmem>>, %arg3: memref<8x128xf32, #tpu.memory_space<vmem>>) attributes {dimension_semantics = [], scalar_prefetch = 0 : i64, scratch_operands = 0 : i64, tpu.core_type = #tpu.core_type<tc>} {
    %c0 = arith.constant 0 : index
    %c0_0 = arith.constant 0 : index
    %0 = vector.load %arg0[%c0, %c0_0] : memref<128x128xf32, #tpu.memory_space<vmem>>, vector<128x128xf32>
    %c0_1 = arith.constant 0 : index
    %c0_2 = arith.constant 0 : index
    %1 = vector.load %arg1[%c0_1, %c0_2] : memref<24x128xf32, #tpu.memory_space<vmem>>, vector<8x128xf32>
    %c8 = arith.constant 8 : index
    %c0_3 = arith.constant 0 : index
    %2 = vector.load %arg1[%c8, %c0_3] : memref<24x128xf32, #tpu.memory_space<vmem>>, vector<8x8xf32>
    %c16 = arith.constant 16 : index
    %c0_4 = arith.constant 0 : index
    %3 = vector.load %arg1[%c16, %c0_4] : memref<24x128xf32, #tpu.memory_space<vmem>>, vector<8x8xf32>
    %c0_5 = arith.constant 0 : index
    %c0_6 = arith.constant 0 : index
    %4 = vector.load %arg2[%c0_5, %c0_6] : memref<136x512xf32, #tpu.memory_space<vmem>>, vector<128x128xf32>
    %c0_7 = arith.constant 0 : index
    %c128 = arith.constant 128 : index
    %5 = vector.load %arg2[%c0_7, %c128] : memref<136x512xf32, #tpu.memory_space<vmem>>, vector<128x128xf32>
    %c0_8 = arith.constant 0 : index
    %c256 = arith.constant 256 : index
    %6 = vector.load %arg2[%c0_8, %c256] : memref<136x512xf32, #tpu.memory_space<vmem>>, vector<128x128xf32>
    %c0_9 = arith.constant 0 : index
    %c384 = arith.constant 384 : index
    %7 = vector.load %arg2[%c0_9, %c384] : memref<136x512xf32, #tpu.memory_space<vmem>>, vector<128x128xf32>
    %c128_10 = arith.constant 128 : index
    %c0_11 = arith.constant 0 : index
    %8 = vector.load %arg2[%c128_10, %c0_11] : memref<136x512xf32, #tpu.memory_space<vmem>>, vector<8x128xf32>
    %c128_12 = arith.constant 128 : index
    %c128_13 = arith.constant 128 : index
    %9 = vector.load %arg2[%c128_12, %c128_13] : memref<136x512xf32, #tpu.memory_space<vmem>>, vector<8x128xf32>
    %c128_14 = arith.constant 128 : index
    %c256_15 = arith.constant 256 : index
    %10 = vector.load %arg2[%c128_14, %c256_15] : memref<136x512xf32, #tpu.memory_space<vmem>>, vector<8x128xf32>
    %c128_16 = arith.constant 128 : index
    %c384_17 = arith.constant 384 : index
    %11 = vector.load %arg2[%c128_16, %c384_17] : memref<136x512xf32, #tpu.memory_space<vmem>>, vector<8x128xf32>
    %cst = arith.constant dense<0.000000e+00> : vector<8x128xf32>
    %12 = tpu.matmul %1, %0, %cst {dimension_numbers = #tpu.dot_dimension_numbers<[1], [0], [0], [1], [0, 0, 1, 1], [], []>} : vector<8x128xf32>, vector<128x128xf32>, vector<8x128xf32> -> vector<8x128xf32>
    %cst_18 = arith.constant dense<0.000000e+00> : vector<8x128xf32>
    %13 = tpu.matmul %12, %4, %cst_18 {dimension_numbers = #tpu.dot_dimension_numbers<[1], [0], [0], [1], [0, 0, 1, 1], [], []>} : vector<8x128xf32>, vector<128x128xf32>, vector<8x128xf32> -> vector<8x128xf32>
    %14 = arith.addf %13, %8 : vector<8x128xf32>
    %cst_19 = arith.constant 0.000000e+00 : f32
    %15 = vector.broadcast %cst_19 : f32 to vector<8x128xf32>
    %16 = arith.maximumf %14, %15 : vector<8x128xf32>
    %cst_20 = arith.constant dense<0.000000e+00> : vector<8x128xf32>
    %17 = tpu.matmul %2, %16, %cst_20 {dimension_numbers = #tpu.dot_dimension_numbers<[1], [0], [0], [1], [0, 0, 1, 1], [], []>} : vector<8x8xf32>, vector<8x128xf32>, vector<8x128xf32> -> vector<8x128xf32>
    %cst_21 = arith.constant dense<0.000000e+00> : vector<8x128xf32>
    %18 = tpu.matmul %17, %5, %cst_21 {dimension_numbers = #tpu.dot_dimension_numbers<[1], [0], [0], [1], [0, 0, 1, 1], [], []>} : vector<8x128xf32>, vector<128x128xf32>, vector<8x128xf32> -> vector<8x128xf32>
    %19 = arith.addf %18, %9 : vector<8x128xf32>
    %cst_22 = arith.constant 0.000000e+00 : f32
    %20 = vector.broadcast %cst_22 : f32 to vector<8x128xf32>
    %21 = arith.maximumf %19, %20 : vector<8x128xf32>
    %cst_23 = arith.constant dense<0.000000e+00> : vector<8x128xf32>
    %22 = tpu.matmul %3, %21, %cst_23 {dimension_numbers = #tpu.dot_dimension_numbers<[1], [0], [0], [1], [0, 0, 1, 1], [], []>} : vector<8x8xf32>, vector<8x128xf32>, vector<8x128xf32> -> vector<8x128xf32>
    %cst_24 = arith.constant dense<0.000000e+00> : vector<8x128xf32>
    %23 = tpu.matmul %22, %6, %cst_24 {dimension_numbers = #tpu.dot_dimension_numbers<[1], [0], [0], [1], [0, 0, 1, 1], [], []>} : vector<8x128xf32>, vector<128x128xf32>, vector<8x128xf32> -> vector<8x128xf32>
    %24 = arith.addf %23, %10 : vector<8x128xf32>
    %25 = math.tanh %24 : vector<8x128xf32>
    %cst_25 = arith.constant dense<0.000000e+00> : vector<8x128xf32>
    %26 = tpu.matmul %25, %7, %cst_25 {dimension_numbers = #tpu.dot_dimension_numbers<[1], [0], [0], [1], [0, 0, 1, 1], [], []>} : vector<8x128xf32>, vector<128x128xf32>, vector<8x128xf32> -> vector<8x128xf32>
    %27 = arith.addf %26, %11 : vector<8x128xf32>
    %c0_26 = arith.constant 0 : index
    %c0_27 = arith.constant 0 : index
    %28 = vector.load %arg3[%c0_26, %c0_27] : memref<8x128xf32, #tpu.memory_space<vmem>>, vector<8x128xf32>
    tpu.vector_store %arg3[%c0_26, %c0_27], %27 {strides = array<i32>} : memref<8x128xf32, #tpu.memory_space<vmem>>, vector<8x128xf32>,
    return
  }
}

</mosaic_0001>

<llo_original>
// kernel: tpu_custom_call.1
$region0: #{tpu_custom_call.1}
  #allocation0 [shape = 'u32[]', space=smem, size = 0x4, offset = 0x4, fixed_abs, tag = 'smem constant byte address 0x4 - core index']
  #allocation1 [shape = 'u32[72,128]{1,0:T(1,128)}', space=vmem, size = 0x9000, scoped, tag = 'internal scratch']
  %s0 = inlined_call_operand.hbm [shape: f32[128,128], index: 0, kind: input, shape index: {}]
  %s1 = inlined_call_operand.hbm [shape: f32[24,128], index: 1, kind: input, shape index: {}]
  %s2 = inlined_call_operand.hbm [shape: f32[136,512], index: 2, kind: input, shape index: {}]
  %s3 = inlined_call_operand.hbm [shape: f32[8,128], index: 3, kind: output, shape index: {}]
  %s4 = sld [smem:[#allocation0]]
  $region34: #{tpu_custom_call.1} parent=0
    _
  %s6 = ssub.s32 1, %s4
  %s7 = scalar_select 0, %s6, %s4
  $region1: #{tpu_custom_call.1} parent=0
    #allocation2 [shape = 'u8[65536]{0}', space=vmem, size = 0x10000, scoped, tag = 'input window, operand 0, single buffered']
    #allocation3 [shape = 's32[1]{0}', space=sflag, size = 0x4, scoped, tag = 'scoped memory for tpu_custom_call.1']
    #allocation4 [shape = 's32[1]{0}', space=sflag, size = 0x4, scoped, tag = 'scoped memory for tpu_custom_call.1']
    #allocation5 [shape = 'u8[12288]{0}', space=vmem, size = 0x3000, scoped, tag = 'input window, operand 1, single buffered']
    #allocation6 [shape = 's32[1]{0}', space=sflag, size = 0x4, scoped, tag = 'scoped memory for tpu_custom_call.1']
    #allocation7 [shape = 'u8[278528]{0}', space=vmem, size = 0x44000, scoped, tag = 'input window, operand 2, single buffered']
    #allocation8 [shape = 'u8[4096]{0}', space=vmem, size = 0x1000, scoped, tag = 'output window, operand 0, single buffered']
    %8 = vsyncpa [#allocation3], 0
    %9 = vsyncpa [#allocation6], 0
    %10 = vsyncpa [#allocation4], 0
    // Predicated region
    $region2: #{tpu_custom_call.1} parent=1 // pred_check
      _
    $region3: #{tpu_custom_call.1} parent=1 // pred_check_branch
      %12 = sbr.rel (0) target = $region5
    $region4: #{tpu_custom_call.1} parent=1 // pred_region
      %14 = vsyncadd [#allocation3], 0
      %s15 = sshll.u32 %s0, 4
      %s16 = int_to_ptr.hbm [resolvable:$true] %s15
      %s17 = sshll.u32 [#allocation2], 4
      %s18 = int_to_ptr.vmem [resolvable:$true] %s17
      %23 = dma.hbm_to_vmem [thread:$0]  %s16, 2048, %s18, [#allocation3], 128, 128, 8
    $region5: #{tpu_custom_call.1} parent=1 // pred_fallthru
      _
    // Predicated region
    $region6: #{tpu_custom_call.1} parent=1 // pred_check
      _
    $region7: #{tpu_custom_call.1} parent=1 // pred_check_branch
      %25 = sbr.rel (0) target = $region9
    $region8: #{tpu_custom_call.1} parent=1 // pred_region
      %27 = vsyncadd [#allocation6], 0
      %s28 = sshll.u32 %s1, 4
      %s29 = int_to_ptr.hbm [resolvable:$true] %s28
      %s30 = sshll.u32 [#allocation5], 4
      %s31 = int_to_ptr.vmem [resolvable:$true] %s30
      %36 = dma.hbm_to_vmem [thread:$0]  %s29, 384, %s31, [#allocation6], 128, 128, 8
    $region9: #{tpu_custom_call.1} parent=1 // pred_fallthru
      _
    // Predicated region
    $region10: #{tpu_custom_call.1} parent=1 // pred_check
      _
    $region11: #{tpu_custom_call.1} parent=1 // pred_check_branch
      %38 = sbr.rel (0) target = $region13
    $region12: #{tpu_custom_call.1} parent=1 // pred_region
      %40 = vsyncadd [#allocation6], 0
      %s41 = sshll.u32 %s2, 4
      %s42 = int_to_ptr.hbm [resolvable:$true] %s41
      %s43 = sshll.u32 [#allocation7], 4
      %s44 = int_to_ptr.vmem [resolvable:$true] %s43
      %49 = dma.hbm_to_vmem [thread:$0]  %s42, 8704, %s44, [#allocation6], 512, 512, 32
    $region13: #{tpu_custom_call.1} parent=1 // pred_fallthru
      _
    // Predicated region
    $region14: #{tpu_custom_call.1} parent=1 // pred_check
      _
    $region15: #{tpu_custom_call.1} parent=1 // pred_check_branch
      %51 = sbr.rel (0) target = $region17
    $region16: #{tpu_custom_call.1} parent=1 // pred_region
      %53 = dma.done [#allocation3], 2048
    $region17: #{tpu_custom_call.1} parent=1 // pred_fallthru
      _
    // Predicated region
    $region18: #{tpu_custom_call.1} parent=1 // pred_check
      _
    $region19: #{tpu_custom_call.1} parent=1 // pred_check_branch
      %55 = sbr.rel (0) target = $region21
    $region20: #{tpu_custom_call.1} parent=1 // pred_region
      %57 = dma.done [#allocation6], 384
    $region21: #{tpu_custom_call.1} parent=1 // pred_fallthru
      _
    // Predicated region
    $region22: #{tpu_custom_call.1} parent=1 // pred_check
      _
    $region23: #{tpu_custom_call.1} parent=1 // pred_check_branch
      %59 = sbr.rel (0) target = $region25
    $region24: #{tpu_custom_call.1} parent=1 // pred_region
      %61 = dma.done [#allocation6], 8704
    $region25: #{tpu_custom_call.1} parent=1 // pred_fallthru
      _
    %v62 = vld [vmem:[#allocation2] sm:$0xff]
    %v63 = vld [vmem:[#allocation2 + $0x8] sm:$0xff]
    %v64 = vld [vmem:[#allocation2 + $0x10] sm:$0xff]
    %v65 = vld [vmem:[#allocation2 + $0x18] sm:$0xff]
    %v66 = vld [vmem:[#allocation2 + $0x20] sm:$0xff]
    %v67 = vld [vmem:[#allocation2 + $0x28] sm:$0xff]
    %v68 = vld [vmem:[#allocation2 + $0x30] sm:$0xff]
    %v69 = vld [vmem:[#allocation2 + $0x38] sm:$0xff]
    %v70 = vld [vmem:[#allocation2 + $0x40] sm:$0xff]
    %v71 = vld [vmem:[#allocation2 + $0x48] sm:$0xff]
    %v72 = vld [vmem:[#allocation2 + $0x50] sm:$0xff]
    %v73 = vld [vmem:[#allocation2 + $0x58] sm:$0xff]
    %v74 = vld [vmem:[#allocation2 + $0x60] sm:$0xff]
    %v75 = vld [vmem:[#allocation2 + $0x68] sm:$0xff]
    %v76 = vld [vmem:[#allocation2 + $0x70] sm:$0xff]
    %v77 = vld [vmem:[#allocation2 + $0x78] sm:$0xff]
    %v78 = vld [vmem:[#allocation5] sm:$0xff]
    %v79 = vld [vmem:[#allocation5 + $0x8] sm:$0xff]
    %v80 = vld [vmem:[#allocation5 + $0x10] sm:$0xff]
    %v81 = vld [vmem:[#allocation7] sm:$0xff]
    %v82 = vld [vmem:[#allocation7 + $0x20] sm:$0xff]
    %v83 = vld [vmem:[#allocation7 + $0x40] sm:$0xff]
    %v84 = vld [vmem:[#allocation7 + $0x60] sm:$0xff]
    %v85 = vld [vmem:[#allocation7 + $0x80] sm:$0xff]
    %v86 = vld [vmem:[#allocation7 + $0xa0] sm:$0xff]
    %v87 = vld [vmem:[#allocation7 + $0xc0] sm:$0xff]
    %v88 = vld [vmem:[#allocation7 + $0xe0] sm:$0xff]
    %v89 = vld [vmem:[#allocation7 + $0x100] sm:$0xff]
    %v90 = vld [vmem:[#allocation7 + $0x120] sm:$0xff]
    %v91 = vld [vmem:[#allocation7 + $0x140] sm:$0xff]
    %v92 = vld [vmem:[#allocation7 + $0x160] sm:$0xff]
    %v93 = vld [vmem:[#allocation7 + $0x180] sm:$0xff]
    %v94 = vld [vmem:[#allocation7 + $0x1a0] sm:$0xff]
    %v95 = vld [vmem:[#allocation7 + $0x1c0] sm:$0xff]
    %v96 = vld [vmem:[#allocation7 + $0x1e0] sm:$0xff]
    %v97 = vld [vmem:[#allocation7 + $0x8] sm:$0xff]
    %v98 = vld [vmem:[#allocation7 + $0x28] sm:$0xff]
    %v99 = vld [vmem:[#allocation7 + $0x48] sm:$0xff]
    %v100 = vld [vmem:[#allocation7 + $0x68] sm:$0xff]
    %v101 = vld [vmem:[#allocation7 + $0x88] sm:$0xff]
    %v102 = vld [vmem:[#allocation7 + $0xa8] sm:$0xff]
    %v103 = vld [vmem:[#allocation7 + $0xc8] sm:$0xff]
    %v104 = vld [vmem:[#allocation7 + $0xe8] sm:$0xff]
    %v105 = vld [vmem:[#allocation7 + $0x108] sm:$0xff]
    %v106 = vld [vmem:[#allocation7 + $0x128] sm:$0xff]
    %v107 = vld [vmem:[#allocation7 + $0x148] sm:$0xff]
    %v108 = vld [vmem:[#allocation7 + $0x168] sm:$0xff]
    %v109 = vld [vmem:[#allocation7 + $0x188] sm:$0xff]
    %v110 = vld [vmem:[#allocation7 + $0x1a8] sm:$0xff]
    %v111 = vld [vmem:[#allocation7 + $0x1c8] sm:$0xff]
    %v112 = vld [vmem:[#allocation7 + $0x1e8] sm:$0xff]
    %v113 = vld [vmem:[#allocation7 + $0x10] sm:$0xff]
    %v114 = vld [vmem:[#allocation7 + $0x30] sm:$0xff]
    %v115 = vld [vmem:[#allocation7 + $0x50] sm:$0xff]
    %v116 = vld [vmem:[#allocation7 + $0x70] sm:$0xff]
    %v117 = vld [vmem:[#allocation7 + $0x90] sm:$0xff]
    %v118 = vld [vmem:[#allocation7 + $0xb0] sm:$0xff]
    %v119 = vld [vmem:[#allocation7 + $0xd0] sm:$0xff]
    %v120 = vld [vmem:[#allocation7 + $0xf0] sm:$0xff]
    %v121 = vld [vmem:[#allocation7 + $0x110] sm:$0xff]
    %v122 = vld [vmem:[#allocation7 + $0x130] sm:$0xff]
    %v123 = vld [vmem:[#allocation7 + $0x150] sm:$0xff]
    %v124 = vld [vmem:[#allocation7 + $0x170] sm:$0xff]
    %v125 = vld [vmem:[#allocation7 + $0x190] sm:$0xff]
    %v126 = vld [vmem:[#allocation7 + $0x1b0] sm:$0xff]
    %v127 = vld [vmem:[#allocation7 + $0x1d0] sm:$0xff]
    %v128 = vld [vmem:[#allocation7 + $0x1f0] sm:$0xff]
    %v129 = vld [vmem:[#allocation7 + $0x18] sm:$0xff]
    %v130 = vld [vmem:[#allocation7 + $0x38] sm:$0xff]
    %v131 = vld [vmem:[#allocation7 + $0x58] sm:$0xff]
    %v132 = vld [vmem:[#allocation7 + $0x78] sm:$0xff]
    %v133 = vld [vmem:[#allocation7 + $0x98] sm:$0xff]
    %v134 = vld [vmem:[#allocation7 + $0xb8] sm:$0xff]
    %v135 = vld [vmem:[#allocation7 + $0xd8] sm:$0xff]
    %v136 = vld [vmem:[#allocation7 + $0xf8] sm:$0xff]
    %v137 = vld [vmem:[#allocation7 + $0x118] sm:$0xff]
    %v138 = vld [vmem:[#allocation7 + $0x138] sm:$0xff]
    %v139 = vld [vmem:[#allocation7 + $0x158] sm:$0xff]
    %v140 = vld [vmem:[#allocation7 + $0x178] sm:$0xff]
    %v141 = vld [vmem:[#allocation7 + $0x198] sm:$0xff]
    %v142 = vld [vmem:[#allocation7 + $0x1b8] sm:$0xff]
    %v143 = vld [vmem:[#allocation7 + $0x1d8] sm:$0xff]
    %v144 = vld [vmem:[#allocation7 + $0x1f8] sm:$0xff]
    %v145 = vld [vmem:[#allocation7 + $0x200] sm:$0xff]
    %v146 = vld [vmem:[#allocation7 + $0x208] sm:$0xff]
    %v147 = vld [vmem:[#allocation7 + $0x210] sm:$0xff]
    %v148 = vld [vmem:[#allocation7 + $0x218] sm:$0xff]
    %149 = vmatpush.msra.mxu0 %v77
    %150 = vmatpush.msra.mxu0 %v76
    %151 = vmatpush.msra.mxu0 %v75
    %152 = vmatpush.msra.mxu0 %v74
    %153 = vmatpush.msra.mxu0 %v73
    %154 = vmatpush.msra.mxu0 %v72
    %155 = vmatpush.msra.mxu0 %v71
    %156 = vmatpush.msra.mxu0 %v70
    %157 = vmatpush.msra.mxu0 %v69
    %158 = vmatpush.msra.mxu0 %v68
    %159 = vmatpush.msra.mxu0 %v67
    %160 = vmatpush.msra.mxu0 %v66
    %161 = vmatpush.msra.mxu0 %v65
    %162 = vmatpush.msra.mxu0 %v64
    %163 = vmatpush.msra.mxu0 %v63
    %164 = vmatpush.msra.mxu0 %v62
    %165 = vmatmul.f32.gmra.mxu0 %v78
    %v166 = vpop.f32.mrf.mxu0
    %v167 = vadd.f32 0.0, %v166
    %168 = vdwg.mxu0
    %169 = vmatpush.msra.mxu0 %v96
    %170 = vmatpush.msra.mxu0 %v95
    %171 = vmatpush.msra.mxu0 %v94
    %172 = vmatpush.msra.mxu0 %v93
    %173 = vmatpush.msra.mxu0 %v92
    %174 = vmatpush.msra.mxu0 %v91
    %175 = vmatpush.msra.mxu0 %v90
    %176 = vmatpush.msra.mxu0 %v89
    %177 = vmatpush.msra.mxu0 %v88
    %178 = vmatpush.msra.mxu0 %v87
    %179 = vmatpush.msra.mxu0 %v86
    %180 = vmatpush.msra.mxu0 %v85
    %181 = vmatpush.msra.mxu0 %v84
    %182 = vmatpush.msra.mxu0 %v83
    %183 = vmatpush.msra.mxu0 %v82
    %184 = vmatpush.msra.mxu0 %v81
    %185 = vmatmul.f32.gmra.mxu0 %v167
    %v186 = vpop.f32.mrf.mxu0
    %v187 = vadd.f32 %v145, %v186
    %188 = vdwg.mxu0
    %v189 = vmax.f32 %v187, 0.0
    %vm190 = vcmask 64512
    %v192 = vsel %vm190, %v79, 0
    %194 = vmatpush.msra.mxu0 0.0
    %195 = vmatpush.msra.mxu0 0.0
    %196 = vmatpush.msra.mxu0 0.0
    %197 = vmatpush.msra.mxu0 0.0
    %198 = vmatpush.msra.mxu0 0.0
    %199 = vmatpush.msra.mxu0 0.0
    %200 = vmatpush.msra.mxu0 0.0
    %201 = vmatpush.msra.mxu0 0.0
    %202 = vmatpush.msra.mxu0 0.0
    %203 = vmatpush.msra.mxu0 0.0
    %204 = vmatpush.msra.mxu0 0.0
    %205 = vmatpush.msra.mxu0 0.0
    %206 = vmatpush.msra.mxu0 0.0
    %207 = vmatpush.msra.mxu0 0.0
    %208 = vmatpush.msra.mxu0 0.0
    %209 = vmatpush.msra.mxu0 %v189
    %210 = vmatmul.f32.gmra.mxu0 %v192
    %v211 = vpop.f32.mrf.mxu0
    %v212 = vadd.f32 0.0, %v211
    %213 = vdwg.mxu0
    %214 = vmatpush.msra.mxu0 %v112
    %215 = vmatpush.msra.mxu0 %v111
    %216 = vmatpush.msra.mxu0 %v110
    %217 = vmatpush.msra.mxu0 %v109
    %218 = vmatpush.msra.mxu0 %v108
    %219 = vmatpush.msra.mxu0 %v107
    %220 = vmatpush.msra.mxu0 %v106
    %221 = vmatpush.msra.mxu0 %v105
    %222 = vmatpush.msra.mxu0 %v104
    %223 = vmatpush.msra.mxu0 %v103
    %224 = vmatpush.msra.mxu0 %v102
    %225 = vmatpush.msra.mxu0 %v101
    %226 = vmatpush.msra.mxu0 %v100
    %227 = vmatpush.msra.mxu0 %v99
    %228 = vmatpush.msra.mxu0 %v98
    %229 = vmatpush.msra.mxu0 %v97
    %230 = vmatmul.f32.gmra.mxu0 %v212
    %v231 = vpop.f32.mrf.mxu0
    %v232 = vadd.f32 %v146, %v231
    %233 = vdwg.mxu0
    %v234 = vmax.f32 %v232, 0.0
    %v236 = vsel %vm190, %v80, 0
    %238 = vmatpush.msra.mxu0 0.0
    %239 = vmatpush.msra.mxu0 0.0
    %240 = vmatpush.msra.mxu0 0.0
    %241 = vmatpush.msra.mxu0 0.0
    %242 = vmatpush.msra.mxu0 0.0
    %243 = vmatpush.msra.mxu0 0.0
    %244 = vmatpush.msra.mxu0 0.0
    %245 = vmatpush.msra.mxu0 0.0
    %246 = vmatpush.msra.mxu0 0.0
    %247 = vmatpush.msra.mxu0 0.0
    %248 = vmatpush.msra.mxu0 0.0
    %249 = vmatpush.msra.mxu0 0.0
    %250 = vmatpush.msra.mxu0 0.0
    %251 = vmatpush.msra.mxu0 0.0
    %252 = vmatpush.msra.mxu0 0.0
    %253 = vmatpush.msra.mxu0 %v234
    %254 = vmatmul.f32.gmra.mxu0 %v236
    %v255 = vpop.f32.mrf.mxu0
    %v256 = vadd.f32 0.0, %v255
    %257 = vdwg.mxu0
    %258 = vmatpush.msra.mxu0 %v128
    %259 = vmatpush.msra.mxu0 %v127
    %260 = vmatpush.msra.mxu0 %v126
    %261 = vmatpush.msra.mxu0 %v125
    %262 = vmatpush.msra.mxu0 %v124
    %263 = vmatpush.msra.mxu0 %v123
    %264 = vmatpush.msra.mxu0 %v122
    %265 = vmatpush.msra.mxu0 %v121
    %266 = vmatpush.msra.mxu0 %v120
    %267 = vmatpush.msra.mxu0 %v119
    %268 = vmatpush.msra.mxu0 %v118
    %269 = vmatpush.msra.mxu0 %v117
    %270 = vmatpush.msra.mxu0 %v116
    %271 = vmatpush.msra.mxu0 %v115
    %272 = vmatpush.msra.mxu0 %v114
    %273 = vmatpush.msra.mxu0 %v113
    %274 = vmatmul.f32.gmra.mxu0 %v256
    %v275 = vpop.f32.mrf.mxu0
    %v276 = vadd.f32 %v147, %v275
    %277 = vdwg.mxu0
    %v278 = vtanh.pop %v276
    %279 = vmatpush.msra.mxu0 %v144
    %280 = vmatpush.msra.mxu0 %v143
    %281 = vmatpush.msra.mxu0 %v142
    %282 = vmatpush.msra.mxu0 %v141
    %283 = vmatpush.msra.mxu0 %v140
    %284 = vmatpush.msra.mxu0 %v139
    %285 = vmatpush.msra.mxu0 %v138
    %286 = vmatpush.msra.mxu0 %v137
    %287 = vmatpush.msra.mxu0 %v136
    %288 = vmatpush.msra.mxu0 %v135
    %289 = vmatpush.msra.mxu0 %v134
    %290 = vmatpush.msra.mxu0 %v133
    %291 = vmatpush.msra.mxu0 %v132
    %292 = vmatpush.msra.mxu0 %v131
    %293 = vmatpush.msra.mxu0 %v130
    %294 = vmatpush.msra.mxu0 %v129
    %295 = vmatmul.f32.gmra.mxu0 %v278
    %v296 = vpop.f32.mrf.mxu0
    %v297 = vadd.f32 %v148, %v296
    %298 = vdwg.mxu0
    %299 = vst [vmem:[#allocation8] sm:$0xff] %v297
    // Predicated region
    $region26: #{tpu_custom_call.1} parent=1 // pred_check
      _
    $region27: #{tpu_custom_call.1} parent=1 // pred_check_branch
      %301 = sbr.rel (0) target = $region29
    $region28: #{tpu_custom_call.1} parent=1 // pred_region
      %303 = vsyncadd [#allocation4], 0
      %s305 = sshll.u32 [#allocation8], 4
      %s306 = int_to_ptr.vmem [resolvable:$true] %s305
      %s307 = sshll.u32 %s3, 4
      %s308 = int_to_ptr.hbm [resolvable:$true] %s307
      %310 = dma.vmem_to_hbm [thread:$0]  %s306, 128, %s308, [#allocation4]
    $region29: #{tpu_custom_call.1} parent=1 // pred_fallthru
      _
    // Predicated region
    $region30: #{tpu_custom_call.1} parent=1 // pred_check
      _
    $region31: #{tpu_custom_call.1} parent=1 // pred_check_branch
      %312 = sbr.rel (0) target = $region33
    $region32: #{tpu_custom_call.1} parent=1 // pred_region
      %314 = dma.done [#allocation4], 128
    $region33: #{tpu_custom_call.1} parent=1 // pred_fallthru
      _
    %315 = vsyncpa [#allocation3], 1
    %316 = vsyncpa [#allocation6], 1
    %317 = vsyncpa [#allocation4], 1

</llo_original>
